<compile_context>
chip_gen: v6e
topology: v6e:2x2x1
jax: 0.10.0
libtpu: 0.0.40
codegen_flags: <defaults>
</compile_context>

<pallas_src>
import functools

import jax
import jax.numpy as jnp
from jax import lax
from jax.experimental import pallas as pl
from jax.experimental.pallas import tpu as pltpu

_VMEM = pl.BlockSpec(memory_space=pltpu.MemorySpace.VMEM)
_LANES = 128
_SUBLANES = 8


def _round_up(n, m):
    return ((n + m - 1) // m) * m


def _round_up_lanes(n):
    return max(_LANES, _round_up(n, _LANES))


# ----------------------------- Fused Pallas kernel ----------------------------- #

def fused_gnn_ce_kernel(src_ref, dst_ref, x_ref, w1_ref, b1_ref, w2_ref, b2_ref, y_ref,
                        loss_ref, *, num_classes, batch_size, batch_pad):
    """adjacency build -> relu(GraphConv1) -> GraphConv2 -> masked softmax CE, in VMEM."""
    hpad = w1_ref.shape[1] // 2        # padded hidden dim (multiple of 128)
    cpad = w2_ref.shape[1] // 2        # padded class dim  (multiple of 128)
    n = x_ref.shape[0]
    e = src_ref.shape[0]

    # ---- in-kernel adjacency: A[dst, src] = #edges src->dst ---------------------
    # One-hot edge masks from iota+compare (VPU), contracted over E on the MXU.
    node = lax.broadcasted_iota(jnp.int32, (e, n), 1)
    s_src = (node == src_ref[...]).astype(jnp.bfloat16)                   # [E, N]
    s_dst = (node == dst_ref[...]).astype(jnp.bfloat16)                   # [E, N]
    adj = lax.dot_general(s_dst, s_src, (((0,), (0,)), ((), ())),
                          preferred_element_type=jnp.float32)             # [N, N]
    adj = adj.astype(jnp.bfloat16)     # small integer edge counts -> exact in bf16

    x = x_ref[...]                     # [N, F] bf16

    # ---- layer 1 (reordered): h = relu(A @ (x@W1_rel) + x@W1_root + b1) --------
    t1 = jnp.dot(x, w1_ref[...], preferred_element_type=jnp.float32)      # [N, 2*HPAD] f32
    t1_rel = t1[:, :hpad].astype(jnp.bfloat16)                            # aligned lane slice
    h = (jnp.dot(adj, t1_rel, preferred_element_type=jnp.float32)
         + t1[:, hpad:] + b1_ref[...])                                    # f32 epilogue
    h = jnp.maximum(h, 0.0).astype(jnp.bfloat16)                          # [N, HPAD]

    # ---- layer 2 restricted to loss rows: only rows < batch_size feed the CE ----
    t2 = jnp.dot(h, w2_ref[...], preferred_element_type=jnp.float32)      # [N, 2*CPAD] f32
    t2_rel = t2[:, :cpad].astype(jnp.bfloat16)                            # all N rows needed
    adj_b = adj[:batch_pad, :]                                            # [Bp, N]
    logits = (jnp.dot(adj_b, t2_rel, preferred_element_type=jnp.float32)
              + t2[:batch_pad, cpad:] + b2_ref[...])                      # [Bp, CPAD] f32

    # ---- cross entropy (mean over first `batch_size` rows, real classes only) ---
    col = lax.broadcasted_iota(jnp.int32, (batch_pad, cpad), 1)
    logits = jnp.where(col < num_classes, logits, jnp.float32(-1e30))     # mask padded cols
    m = jnp.max(logits, axis=-1, keepdims=True)
    z = logits - m
    lse = jnp.log(jnp.sum(jnp.exp(z), axis=-1, keepdims=True))
    onehot = (col == y_ref[pl.ds(0, batch_pad), :]).astype(jnp.float32)   # [Bp, CPAD]
    logp_y = jnp.sum(onehot * (z - lse), axis=-1, keepdims=True)          # [Bp, 1]
    row = lax.broadcasted_iota(jnp.int32, (batch_pad, 1), 0)
    in_batch = jnp.where(row < batch_size, 1.0, 0.0)                      # first batch rows
    loss_ref[...] = (-jnp.sum(logp_y * in_batch, axis=0, keepdims=True)
                     / jnp.float32(batch_size))                           # [1, 1]


# --------------------------------- Wrappers ------------------------------------ #

def prepare_params(params, h_size, num_classes):
    """Pad output dims to 128 lanes and concat rel/root weights along the out dim."""
    hpad = _round_up_lanes(h_size)
    cpad = _round_up_lanes(num_classes)
    w1_rel = jnp.pad(params["w1_rel"], ((0, 0), (0, hpad - h_size)))
    w1_root = jnp.pad(params["w1_root"], ((0, 0), (0, hpad - h_size)))
    w1 = jnp.concatenate([w1_rel, w1_root], axis=1).astype(jnp.bfloat16)   # [F, 2*HPAD]
    b1 = jnp.pad(params["b1_rel"], ((0, 0), (0, hpad - h_size))).astype(jnp.float32)
    w2_rel = jnp.pad(params["w2_rel"], ((0, hpad - h_size), (0, cpad - num_classes)))
    w2_root = jnp.pad(params["w2_root"], ((0, hpad - h_size), (0, cpad - num_classes)))
    w2 = jnp.concatenate([w2_rel, w2_root], axis=1).astype(jnp.bfloat16)   # [HPAD, 2*CPAD]
    b2 = jnp.pad(params["b2_rel"], ((0, 0), (0, cpad - num_classes))).astype(jnp.float32)
    return w1, b1, w2, b2


@functools.partial(jax.jit, static_argnames=("batch_size", "num_classes", "h_size"))
def test_module_forward(x, edge_index, y, params, batch_size, num_classes, h_size):
    """Full TestModule.forward: returns [loss] (a list with one scalar)."""
    n = x.shape[0]
    e = edge_index.shape[1]

    # Edge list as [E,1] int32 columns; pad E to a sublane multiple with -1 sentinels
    # (a -1 node id matches no iota entry -> zero contribution in-kernel).
    src = edge_index[0].astype(jnp.int32)
    dst = edge_index[1].astype(jnp.int32)
    e_pad = max(_SUBLANES, _round_up(e, _SUBLANES))
    if e_pad != e:
        fill = jnp.full((e_pad - e,), -1, jnp.int32)
        src = jnp.concatenate([src, fill])
        dst = jnp.concatenate([dst, fill])
    src2d = src.reshape(e_pad, 1)
    dst2d = dst.reshape(e_pad, 1)

    w1, b1, w2, b2 = prepare_params(params, h_size, num_classes)
    x_bf = x.astype(jnp.bfloat16)
    y2d = y.astype(jnp.int32).reshape(n, 1)
    batch_pad = min(n, _round_up(batch_size, _SUBLANES))   # static, sublane-aligned

    loss = pl.pallas_call(
        functools.partial(fused_gnn_ce_kernel, num_classes=num_classes,
                          batch_size=batch_size, batch_pad=batch_pad),
        out_shape=jax.ShapeDtypeStruct((1, 1), jnp.float32),
        in_specs=[_VMEM] * 8,
        out_specs=_VMEM,
        compiler_params=pltpu.CompilerParams(vmem_limit_bytes=32 * 1024 * 1024),
    )(src2d, dst2d, x_bf, w1, b1, w2, b2, y2d)[0, 0]
    return [loss]


# ----------------------------------- Main --------------------------------------- #

if __name__ == "__main__":
    # Small synthetic shapes consistent with the module's forward.
    N = 64            # number of graph nodes
    F_IN = 16         # input node-feature dim (data.x.size()[-1])
    H = 32            # h_size
    NUM_CLASSES = 4   # torch.numel(torch.unique(data.y))
    E = 256           # number of edges
    BATCH = 16        # batch_size (loss computed on first BATCH nodes)

    key = jax.random.PRNGKey(0)
    kx, ke1, ke2, ky, kw1, kw2, kw3, kw4 = jax.random.split(key, 8)

    x = jax.random.normal(kx, (N, F_IN), dtype=jnp.float32)
    edge_index = jnp.stack([
        jax.random.randint(ke1, (E,), 0, N, dtype=jnp.int32),   # source nodes j
        jax.random.randint(ke2, (E,), 0, N, dtype=jnp.int32),   # target nodes i
    ])
    y = jax.random.randint(ky, (N,), 0, NUM_CLASSES, dtype=jnp.int32)

    # Deterministic parameter init (GraphConv = lin_rel(with bias) + lin_root(no bias)).
    # Weights stored already transposed: [F_in, F_out], so y = x @ W + b.
    def init_w(k, fan_in, fan_out):
        bound = 1.0 / jnp.sqrt(jnp.float32(fan_in))
        return jax.random.uniform(k, (fan_in, fan_out), jnp.float32, -bound, bound)

    params = {
        "w1_rel": init_w(kw1, F_IN, H),
        "w1_root": init_w(kw2, F_IN, H),
        "b1_rel": jnp.zeros((1, H), jnp.float32),
        "w2_rel": init_w(kw3, H, NUM_CLASSES),
        "w2_root": init_w(kw4, H, NUM_CLASSES),
        "b2_rel": jnp.zeros((1, NUM_CLASSES), jnp.float32),
    }

    out = test_module_forward(x, edge_index, y, params, BATCH, NUM_CLASSES, H)
    loss = jax.block_until_ready(out[0])
    assert loss.shape == () and jnp.isfinite(loss)
    print("KERNEL_OK")
</pallas_src>

<mosaic_0001>
module attributes {stable_mosaic.version = 11 : i64} {
  func.func @fused_gnn_ce_kernel(%arg0: memref<256x1xi32, #tpu.memory_space<vmem>>, %arg1: memref<256x1xi32, #tpu.memory_space<vmem>>, %arg2: memref<64x16xbf16, #tpu.memory_space<vmem>>, %arg3: memref<16x256xbf16, #tpu.memory_space<vmem>>, %arg4: memref<1x128xf32, #tpu.memory_space<vmem>>, %arg5: memref<128x256xbf16, #tpu.memory_space<vmem>>, %arg6: memref<1x128xf32, #tpu.memory_space<vmem>>, %arg7: memref<64x1xi32, #tpu.memory_space<vmem>>, %arg8: memref<1x1xf32, #tpu.memory_space<vmem>>) attributes {dimension_semantics = [], scalar_prefetch = 0 : i64, scratch_operands = 0 : i64, tpu.core_type = #tpu.core_type<tc>} {
    %0 = tpu.iota {dimensions = array<i32: 1>} : vector<256x64xi32>
    %c0 = arith.constant 0 : index
    %c0_0 = arith.constant 0 : index
    %1 = vector.load %arg0[%c0, %c0_0] : memref<256x1xi32, #tpu.memory_space<vmem>>, vector<256x1xi32>
    %2 = vector.broadcast %1 : vector<256x1xi32> to vector<256x64xi32>
    %3 = arith.cmpi eq, %0, %2 : vector<256x64xi32>
    %4 = arith.extui %3 : vector<256x64xi1> to vector<256x64xi32>
    %5 = arith.sitofp %4 : vector<256x64xi32> to vector<256x64xf32>
    %6 = arith.truncf %5 : vector<256x64xf32> to vector<256x64xbf16>
    %c0_1 = arith.constant 0 : index
    %c0_2 = arith.constant 0 : index
    %7 = vector.load %arg1[%c0_1, %c0_2] : memref<256x1xi32, #tpu.memory_space<vmem>>, vector<256x1xi32>
    %8 = vector.broadcast %7 : vector<256x1xi32> to vector<256x64xi32>
    %9 = arith.cmpi eq, %0, %8 : vector<256x64xi32>
    %10 = arith.extui %9 : vector<256x64xi1> to vector<256x64xi32>
    %11 = arith.sitofp %10 : vector<256x64xi32> to vector<256x64xf32>
    %12 = arith.truncf %11 : vector<256x64xf32> to vector<256x64xbf16>
    %cst = arith.constant dense<0.000000e+00> : vector<64x64xf32>
    %13 = tpu.matmul %12, %6, %cst {dimension_numbers = #tpu.dot_dimension_numbers<[0], [0], [1], [1], [0, 1, 1, 1], [], []>} : vector<256x64xbf16>, vector<256x64xbf16>, vector<64x64xf32> -> vector<64x64xf32>
    %14 = arith.truncf %13 : vector<64x64xf32> to vector<64x64xbf16>
    %c0_3 = arith.constant 0 : index
    %c0_4 = arith.constant 0 : index
    %15 = vector.load %arg2[%c0_3, %c0_4] : memref<64x16xbf16, #tpu.memory_space<vmem>>, vector<64x16xbf16>
    %c0_5 = arith.constant 0 : index
    %c0_6 = arith.constant 0 : index
    %16 = vector.load %arg3[%c0_5, %c0_6] : memref<16x256xbf16, #tpu.memory_space<vmem>>, vector<16x256xbf16>
    %cst_7 = arith.constant dense<0.000000e+00> : vector<64x256xf32>
    %17 = tpu.matmul %15, %16, %cst_7 {dimension_numbers = #tpu.dot_dimension_numbers<[1], [0], [0], [1], [0, 0, 1, 1], [], []>} : vector<64x16xbf16>, vector<16x256xbf16>, vector<64x256xf32> -> vector<64x256xf32>
    %18 = vector.extract_strided_slice %17 {offsets = [0, 0], sizes = [64, 128], strides = [1, 1]} : vector<64x256xf32> to vector<64x128xf32>
    %19 = arith.truncf %18 : vector<64x128xf32> to vector<64x128xbf16>
    %cst_8 = arith.constant dense<0.000000e+00> : vector<64x128xf32>
    %20 = tpu.matmul %14, %19, %cst_8 {dimension_numbers = #tpu.dot_dimension_numbers<[1], [0], [0], [1], [0, 0, 1, 1], [], []>} : vector<64x64xbf16>, vector<64x128xbf16>, vector<64x128xf32> -> vector<64x128xf32>
    %21 = vector.extract_strided_slice %17 {offsets = [0, 128], sizes = [64, 128], strides = [1, 1]} : vector<64x256xf32> to vector<64x128xf32>
    %22 = arith.addf %20, %21 : vector<64x128xf32>
    %c0_9 = arith.constant 0 : index
    %c0_10 = arith.constant 0 : index
    %23 = vector.load %arg4[%c0_9, %c0_10] : memref<1x128xf32, #tpu.memory_space<vmem>>, vector<1x128xf32>
    %24 = vector.broadcast %23 : vector<1x128xf32> to vector<64x128xf32>
    %25 = arith.addf %22, %24 : vector<64x128xf32>
    %cst_11 = arith.constant 0.000000e+00 : f32
    %26 = vector.broadcast %cst_11 : f32 to vector<64x128xf32>
    %27 = arith.maximumf %25, %26 : vector<64x128xf32>
    %28 = arith.truncf %27 : vector<64x128xf32> to vector<64x128xbf16>
    %c0_12 = arith.constant 0 : index
    %c0_13 = arith.constant 0 : index
    %29 = vector.load %arg5[%c0_12, %c0_13] : memref<128x256xbf16, #tpu.memory_space<vmem>>, vector<128x256xbf16>
    %cst_14 = arith.constant dense<0.000000e+00> : vector<64x256xf32>
    %30 = tpu.matmul %28, %29, %cst_14 {dimension_numbers = #tpu.dot_dimension_numbers<[1], [0], [0], [1], [0, 0, 1, 1], [], []>} : vector<64x128xbf16>, vector<128x256xbf16>, vector<64x256xf32> -> vector<64x256xf32>
    %31 = vector.extract_strided_slice %30 {offsets = [0, 0], sizes = [64, 128], strides = [1, 1]} : vector<64x256xf32> to vector<64x128xf32>
    %32 = arith.truncf %31 : vector<64x128xf32> to vector<64x128xbf16>
    %33 = vector.extract_strided_slice %14 {offsets = [0, 0], sizes = [16, 64], strides = [1, 1]} : vector<64x64xbf16> to vector<16x64xbf16>
    %cst_15 = arith.constant dense<0.000000e+00> : vector<16x128xf32>
    %34 = tpu.matmul %33, %32, %cst_15 {dimension_numbers = #tpu.dot_dimension_numbers<[1], [0], [0], [1], [0, 0, 1, 1], [], []>} : vector<16x64xbf16>, vector<64x128xbf16>, vector<16x128xf32> -> vector<16x128xf32>
    %35 = vector.extract_strided_slice %30 {offsets = [0, 128], sizes = [16, 128], strides = [1, 1]} : vector<64x256xf32> to vector<16x128xf32>
    %36 = arith.addf %34, %35 : vector<16x128xf32>
    %c0_16 = arith.constant 0 : index
    %c0_17 = arith.constant 0 : index
    %37 = vector.load %arg6[%c0_16, %c0_17] : memref<1x128xf32, #tpu.memory_space<vmem>>, vector<1x128xf32>
    %38 = vector.broadcast %37 : vector<1x128xf32> to vector<16x128xf32>
    %39 = arith.addf %36, %38 : vector<16x128xf32>
    %40 = tpu.iota {dimensions = array<i32: 1>} : vector<16x128xi32>
    %c4_i32 = arith.constant 4 : i32
    %41 = vector.broadcast %c4_i32 : i32 to vector<16x128xi32>
    %42 = arith.cmpi slt, %40, %41 : vector<16x128xi32>
    %cst_18 = arith.constant -1.000000e+30 : f32
    %43 = vector.broadcast %cst_18 : f32 to vector<16x128xf32>
    %44 = arith.select %42, %39, %43 : vector<16x128xi1>, vector<16x128xf32>
    %cst_19 = arith.constant dense<0xFF800000> : vector<16xf32>
    %45 = vector.multi_reduction <maximumf>, %44, %cst_19 [1] : vector<16x128xf32> to vector<16xf32>
    %46 = vector.shape_cast %45 : vector<16xf32> to vector<16x1xf32>
    %47 = vector.broadcast %46 : vector<16x1xf32> to vector<16x128xf32>
    %48 = arith.subf %44, %47 : vector<16x128xf32>
    %49 = math.exp %48 : vector<16x128xf32>
    %cst_20 = arith.constant dense<0.000000e+00> : vector<16xf32>
    %50 = vector.multi_reduction <add>, %49, %cst_20 [1] : vector<16x128xf32> to vector<16xf32>
    %51 = vector.shape_cast %50 : vector<16xf32> to vector<16x1xf32>
    %52 = math.log %51 : vector<16x1xf32>
    %c0_21 = arith.constant 0 : index
    %c0_22 = arith.constant 0 : index
    %53 = vector.load %arg7[%c0_21, %c0_22] : memref<64x1xi32, #tpu.memory_space<vmem>>, vector<16x1xi32>
    %54 = vector.broadcast %53 : vector<16x1xi32> to vector<16x128xi32>
    %55 = arith.cmpi eq, %40, %54 : vector<16x128xi32>
    %56 = arith.extui %55 : vector<16x128xi1> to vector<16x128xi32>
    %57 = arith.sitofp %56 : vector<16x128xi32> to vector<16x128xf32>
    %58 = vector.broadcast %52 : vector<16x1xf32> to vector<16x128xf32>
    %59 = arith.subf %48, %58 : vector<16x128xf32>
    %60 = arith.mulf %57, %59 : vector<16x128xf32>
    %cst_23 = arith.constant dense<0.000000e+00> : vector<16xf32>
    %61 = vector.multi_reduction <add>, %60, %cst_23 [1] : vector<16x128xf32> to vector<16xf32>
    %62 = vector.shape_cast %61 : vector<16xf32> to vector<16x1xf32>
    %63 = tpu.iota {dimensions = array<i32: 0>} : vector<16x1xi32>
    %c16_i32 = arith.constant 16 : i32
    %64 = vector.broadcast %c16_i32 : i32 to vector<16x1xi32>
    %65 = arith.cmpi slt, %63, %64 : vector<16x1xi32>
    %cst_24 = arith.constant 1.000000e+00 : f32
    %cst_25 = arith.constant 0.000000e+00 : f32
    %66 = vector.broadcast %cst_24 : f32 to vector<16x1xf32>
    %67 = vector.broadcast %cst_25 : f32 to vector<16x1xf32>
    %68 = arith.select %65, %66, %67 : vector<16x1xi1>, vector<16x1xf32>
    %69 = arith.mulf %62, %68 : vector<16x1xf32>
    %cst_26 = arith.constant dense<0.000000e+00> : vector<1xf32>
    %70 = vector.multi_reduction <add>, %69, %cst_26 [0] : vector<16x1xf32> to vector<1xf32>
    %71 = vector.shape_cast %70 : vector<1xf32> to vector<1x1xf32>
    %cst_27 = arith.constant 0.000000e+00 : f32
    %72 = vector.broadcast %cst_27 : f32 to vector<1x1xf32>
    %73 = arith.subf %72, %71 : vector<1x1xf32>
    %cst_28 = arith.constant 1.600000e+01 : f32
    %74 = vector.broadcast %cst_28 : f32 to vector<1x1xf32>
    %75 = arith.divf %73, %74 : vector<1x1xf32>
    %c0_29 = arith.constant 0 : index
    %c0_30 = arith.constant 0 : index
    %76 = vector.load %arg8[%c0_29, %c0_30] : memref<1x1xf32, #tpu.memory_space<vmem>>, vector<1x1xf32>
    tpu.vector_store %arg8[%c0_29, %c0_30], %75 {strides = array<i32>} : memref<1x1xf32, #tpu.memory_space<vmem>>, vector<1x1xf32>,
    return
  }
}

</mosaic_0001>

<llo_original>
// kernel: test_module_forward.1
$region0: #{test_module_forward.1}
  #allocation0 [shape = 'u32[]', space=smem, size = 0x4, offset = 0x4, fixed_abs, tag = 'smem constant byte address 0x4 - core index']
  #allocation1 [shape = 'u32[144,128]{1,0:T(1,128)}', space=vmem, size = 0x12000, scoped, tag = 'internal scratch']
  %s0 = inlined_call_operand.vmem [shape: s32[256,1], index: 0, kind: input, shape index: {}]
  %s1 = inlined_call_operand.vmem [shape: s32[256,1], index: 1, kind: input, shape index: {}]
  %s2 = inlined_call_operand.vmem [shape: bf16[64,16], index: 2, kind: input, shape index: {}]
  %s3 = inlined_call_operand.vmem [shape: bf16[16,256], index: 3, kind: input, shape index: {}]
  %s4 = inlined_call_operand.vmem [shape: f32[1,128], index: 4, kind: input, shape index: {}]
  %s5 = inlined_call_operand.vmem [shape: bf16[128,256], index: 5, kind: input, shape index: {}]
  %s6 = inlined_call_operand.vmem [shape: f32[1,128], index: 6, kind: input, shape index: {}]
  %s7 = inlined_call_operand.vmem [shape: s32[64,1], index: 7, kind: input, shape index: {}]
  %s8 = inlined_call_operand.hbm [shape: f32[1,1], index: 8, kind: output, shape index: {}]
  %s9 = sld [smem:[#allocation0]]
  $region42: #{test_module_forward.1} parent=0
    _
  %s11 = ssub.s32 1, %s9
  %s12 = scalar_select 0, %s11, %s9
  $region1: #{test_module_forward.1} parent=0
    #allocation2 [shape = 'u8[512]{0}', space=vmem, size = 0x400, scoped, tag = 'output window, operand 0, single buffered']
    #allocation3 [shape = 's32[1]{0}', space=sflag, size = 0x4, scoped, tag = 'scoped memory for test_module_forward.1']
    %13 = vsyncpa [#allocation3], 0
    // Predicated region
    $region2: #{test_module_forward.1} parent=1 // pred_check
      _
    $region3: #{test_module_forward.1} parent=1 // pred_check_branch
      %15 = sbr.rel (0) target = $region5
    $region4: #{test_module_forward.1} parent=1 // pred_region
      _
    $region5: #{test_module_forward.1} parent=1 // pred_fallthru
      _
    // Predicated region
    $region6: #{test_module_forward.1} parent=1 // pred_check
      _
    $region7: #{test_module_forward.1} parent=1 // pred_check_branch
      %17 = sbr.rel (0) target = $region9
    $region8: #{test_module_forward.1} parent=1 // pred_region
      _
    $region9: #{test_module_forward.1} parent=1 // pred_fallthru
      _
    // Predicated region
    $region10: #{test_module_forward.1} parent=1 // pred_check
      _
    $region11: #{test_module_forward.1} parent=1 // pred_check_branch
      %19 = sbr.rel (0) target = $region13
    $region12: #{test_module_forward.1} parent=1 // pred_region
      _
    $region13: #{test_module_forward.1} parent=1 // pred_fallthru
      _
    // Predicated region
    $region14: #{test_module_forward.1} parent=1 // pred_check
      _
    $region15: #{test_module_forward.1} parent=1 // pred_check_branch
      %21 = sbr.rel (0) target = $region17
    $region16: #{test_module_forward.1} parent=1 // pred_region
      _
    $region17: #{test_module_forward.1} parent=1 // pred_fallthru
      _
    // Predicated region
    $region18: #{test_module_forward.1} parent=1 // pred_check
      _
    $region19: #{test_module_forward.1} parent=1 // pred_check_branch
      %23 = sbr.rel (0) target = $region21
    $region20: #{test_module_forward.1} parent=1 // pred_region
      _
    $region21: #{test_module_forward.1} parent=1 // pred_fallthru
      _
    // Predicated region
    $region22: #{test_module_forward.1} parent=1 // pred_check
      _
    $region23: #{test_module_forward.1} parent=1 // pred_check_branch
      %25 = sbr.rel (0) target = $region25
    $region24: #{test_module_forward.1} parent=1 // pred_region
      _
    $region25: #{test_module_forward.1} parent=1 // pred_fallthru
      _
    // Predicated region
    $region26: #{test_module_forward.1} parent=1 // pred_check
      _
    $region27: #{test_module_forward.1} parent=1 // pred_check_branch
      %27 = sbr.rel (0) target = $region29
    $region28: #{test_module_forward.1} parent=1 // pred_region
      _
    $region29: #{test_module_forward.1} parent=1 // pred_fallthru
      _
    // Predicated region
    $region30: #{test_module_forward.1} parent=1 // pred_check
      _
    $region31: #{test_module_forward.1} parent=1 // pred_check_branch
      %29 = sbr.rel (0) target = $region33
    $region32: #{test_module_forward.1} parent=1 // pred_region
      _
    $region33: #{test_module_forward.1} parent=1 // pred_fallthru
      _
    %v31 = vlaneseq
    %v32 = vand.u32 %v31, 127
    %v33 = vld [vmem:[%s0] sm:$0xff]
    %v34 = vld [vmem:[%s0 + $0x8] sm:$0xff]
    %v35 = vld [vmem:[%s0 + $0x10] sm:$0xff]
    %v36 = vld [vmem:[%s0 + $0x18] sm:$0xff]
    %v37 = vld [vmem:[%s0 + $0x20] sm:$0xff]
    %v38 = vld [vmem:[%s0 + $0x28] sm:$0xff]
    %v39 = vld [vmem:[%s0 + $0x30] sm:$0xff]
    %v40 = vld [vmem:[%s0 + $0x38] sm:$0xff]
    %v41 = vld [vmem:[%s0 + $0x40] sm:$0xff]
    %v42 = vld [vmem:[%s0 + $0x48] sm:$0xff]
    %v43 = vld [vmem:[%s0 + $0x50] sm:$0xff]
    %v44 = vld [vmem:[%s0 + $0x58] sm:$0xff]
    %v45 = vld [vmem:[%s0 + $0x60] sm:$0xff]
    %v46 = vld [vmem:[%s0 + $0x68] sm:$0xff]
    %v47 = vld [vmem:[%s0 + $0x70] sm:$0xff]
    %v48 = vld [vmem:[%s0 + $0x78] sm:$0xff]
    %v49 = vld [vmem:[%s0 + $0x80] sm:$0xff]
    %v50 = vld [vmem:[%s0 + $0x88] sm:$0xff]
    %v51 = vld [vmem:[%s0 + $0x90] sm:$0xff]
    %v52 = vld [vmem:[%s0 + $0x98] sm:$0xff]
    %v53 = vld [vmem:[%s0 + $0xa0] sm:$0xff]
    %v54 = vld [vmem:[%s0 + $0xa8] sm:$0xff]
    %v55 = vld [vmem:[%s0 + $0xb0] sm:$0xff]
    %v56 = vld [vmem:[%s0 + $0xb8] sm:$0xff]
    %v57 = vld [vmem:[%s0 + $0xc0] sm:$0xff]
    %v58 = vld [vmem:[%s0 + $0xc8] sm:$0xff]
    %v59 = vld [vmem:[%s0 + $0xd0] sm:$0xff]
    %v60 = vld [vmem:[%s0 + $0xd8] sm:$0xff]
    %v61 = vld [vmem:[%s0 + $0xe0] sm:$0xff]
    %v62 = vld [vmem:[%s0 + $0xe8] sm:$0xff]
    %v63 = vld [vmem:[%s0 + $0xf0] sm:$0xff]
    %v64 = vld [vmem:[%s0 + $0xf8] sm:$0xff]
    %65 = vset.pattern.permute.xlu0 0
    %66 = vperm.xlu0 %65, %v33
    %v67 = vpop.permute.xlu0 %66
    %68 = vset.pattern.permute.xlu0 0
    %69 = vperm.xlu0 %68, %v34
    %v70 = vpop.permute.xlu0 %69
    %71 = vset.pattern.permute.xlu0 0
    %72 = vperm.xlu0 %71, %v35
    %v73 = vpop.permute.xlu0 %72
    %74 = vset.pattern.permute.xlu0 0
    %75 = vperm.xlu0 %74, %v36
    %v76 = vpop.permute.xlu0 %75
    %77 = vset.pattern.permute.xlu0 0
    %78 = vperm.xlu0 %77, %v37
    %v79 = vpop.permute.xlu0 %78
    %80 = vset.pattern.permute.xlu0 0
    %81 = vperm.xlu0 %80, %v38
    %v82 = vpop.permute.xlu0 %81
    %83 = vset.pattern.permute.xlu0 0
    %84 = vperm.xlu0 %83, %v39
    %v85 = vpop.permute.xlu0 %84
    %86 = vset.pattern.permute.xlu0 0
    %87 = vperm.xlu0 %86, %v40
    %v88 = vpop.permute.xlu0 %87
    %89 = vset.pattern.permute.xlu0 0
    %90 = vperm.xlu0 %89, %v41
    %v91 = vpop.permute.xlu0 %90
    %92 = vset.pattern.permute.xlu0 0
    %93 = vperm.xlu0 %92, %v42
    %v94 = vpop.permute.xlu0 %93
    %95 = vset.pattern.permute.xlu0 0
    %96 = vperm.xlu0 %95, %v43
    %v97 = vpop.permute.xlu0 %96
    %98 = vset.pattern.permute.xlu0 0
    %99 = vperm.xlu0 %98, %v44
    %v100 = vpop.permute.xlu0 %99
    %101 = vset.pattern.permute.xlu0 0
    %102 = vperm.xlu0 %101, %v45
    %v103 = vpop.permute.xlu0 %102
    %104 = vset.pattern.permute.xlu0 0
    %105 = vperm.xlu0 %104, %v46
    %v106 = vpop.permute.xlu0 %105
    %107 = vset.pattern.permute.xlu0 0
    %108 = vperm.xlu0 %107, %v47
    %v109 = vpop.permute.xlu0 %108
    %110 = vset.pattern.permute.xlu0 0
    %111 = vperm.xlu0 %110, %v48
    %v112 = vpop.permute.xlu0 %111
    %113 = vset.pattern.permute.xlu0 0
    %114 = vperm.xlu0 %113, %v49
    %v115 = vpop.permute.xlu0 %114
    %116 = vset.pattern.permute.xlu0 0
    %117 = vperm.xlu0 %116, %v50
    %v118 = vpop.permute.xlu0 %117
    %119 = vset.pattern.permute.xlu0 0
    %120 = vperm.xlu0 %119, %v51
    %v121 = vpop.permute.xlu0 %120
    %122 = vset.pattern.permute.xlu0 0
    %123 = vperm.xlu0 %122, %v52
    %v124 = vpop.permute.xlu0 %123
    %125 = vset.pattern.permute.xlu0 0
    %126 = vperm.xlu0 %125, %v53
    %v127 = vpop.permute.xlu0 %126
    %128 = vset.pattern.permute.xlu0 0
    %129 = vperm.xlu0 %128, %v54
    %v130 = vpop.permute.xlu0 %129
    %131 = vset.pattern.permute.xlu0 0
    %132 = vperm.xlu0 %131, %v55
    %v133 = vpop.permute.xlu0 %132
    %134 = vset.pattern.permute.xlu0 0
    %135 = vperm.xlu0 %134, %v56
    %v136 = vpop.permute.xlu0 %135
    %137 = vset.pattern.permute.xlu0 0
    %138 = vperm.xlu0 %137, %v57
    %v139 = vpop.permute.xlu0 %138
    %140 = vset.pattern.permute.xlu0 0
    %141 = vperm.xlu0 %140, %v58
    %v142 = vpop.permute.xlu0 %141
    %143 = vset.pattern.permute.xlu0 0
    %144 = vperm.xlu0 %143, %v59
    %v145 = vpop.permute.xlu0 %144
    %146 = vset.pattern.permute.xlu0 0
    %147 = vperm.xlu0 %146, %v60
    %v148 = vpop.permute.xlu0 %147
    %149 = vset.pattern.permute.xlu0 0
    %150 = vperm.xlu0 %149, %v61
    %v151 = vpop.permute.xlu0 %150
    %152 = vset.pattern.permute.xlu0 0
    %153 = vperm.xlu0 %152, %v62
    %v154 = vpop.permute.xlu0 %153
    %155 = vset.pattern.permute.xlu0 0
    %156 = vperm.xlu0 %155, %v63
    %v157 = vpop.permute.xlu0 %156
    %158 = vset.pattern.permute.xlu0 0
    %159 = vperm.xlu0 %158, %v64
    %v160 = vpop.permute.xlu0 %159
    %vm161 = vcmp.eq.s32.totalorder %v32, %v67
    %vm162 = vcmp.eq.s32.totalorder %v32, %v70
    %vm163 = vcmp.eq.s32.totalorder %v32, %v73
    %vm164 = vcmp.eq.s32.totalorder %v32, %v76
    %vm165 = vcmp.eq.s32.totalorder %v32, %v79
    %vm166 = vcmp.eq.s32.totalorder %v32, %v82
    %vm167 = vcmp.eq.s32.totalorder %v32, %v85
    %vm168 = vcmp.eq.s32.totalorder %v32, %v88
    %vm169 = vcmp.eq.s32.totalorder %v32, %v91
    %vm170 = vcmp.eq.s32.totalorder %v32, %v94
    %vm171 = vcmp.eq.s32.totalorder %v32, %v97
    %vm172 = vcmp.eq.s32.totalorder %v32, %v100
    %vm173 = vcmp.eq.s32.totalorder %v32, %v103
    %vm174 = vcmp.eq.s32.totalorder %v32, %v106
    %vm175 = vcmp.eq.s32.totalorder %v32, %v109
    %vm176 = vcmp.eq.s32.totalorder %v32, %v112
    %vm177 = vcmp.eq.s32.totalorder %v32, %v115
    %vm178 = vcmp.eq.s32.totalorder %v32, %v118
    %vm179 = vcmp.eq.s32.totalorder %v32, %v121
    %vm180 = vcmp.eq.s32.totalorder %v32, %v124
    %vm181 = vcmp.eq.s32.totalorder %v32, %v127
    %vm182 = vcmp.eq.s32.totalorder %v32, %v130
    %vm183 = vcmp.eq.s32.totalorder %v32, %v133
    %vm184 = vcmp.eq.s32.totalorder %v32, %v136
    %vm185 = vcmp.eq.s32.totalorder %v32, %v139
    %vm186 = vcmp.eq.s32.totalorder %v32, %v142
    %vm187 = vcmp.eq.s32.totalorder %v32, %v145
    %vm188 = vcmp.eq.s32.totalorder %v32, %v148
    %vm189 = vcmp.eq.s32.totalorder %v32, %v151
    %vm190 = vcmp.eq.s32.totalorder %v32, %v154
    %vm191 = vcmp.eq.s32.totalorder %v32, %v157
    %vm192 = vcmp.eq.s32.totalorder %v32, %v160
    %v193 = vsel %vm161, 1, 0
    %v194 = vsel %vm162, 1, 0
    %v195 = vsel %vm163, 1, 0
    %v196 = vsel %vm164, 1, 0
    %v197 = vsel %vm165, 1, 0
    %v198 = vsel %vm166, 1, 0
    %v199 = vsel %vm167, 1, 0
    %v200 = vsel %vm168, 1, 0
    %v201 = vsel %vm169, 1, 0
    %v202 = vsel %vm170, 1, 0
    %v203 = vsel %vm171, 1, 0
    %v204 = vsel %vm172, 1, 0
    %v205 = vsel %vm173, 1, 0
    %v206 = vsel %vm174, 1, 0
    %v207 = vsel %vm175, 1, 0
    %v208 = vsel %vm176, 1, 0
    %v209 = vsel %vm177, 1, 0
    %v210 = vsel %vm178, 1, 0
    %v211 = vsel %vm179, 1, 0
    %v212 = vsel %vm180, 1, 0
    %v213 = vsel %vm181, 1, 0
    %v214 = vsel %vm182, 1, 0
    %v215 = vsel %vm183, 1, 0
    %v216 = vsel %vm184, 1, 0
    %v217 = vsel %vm185, 1, 0
    %v218 = vsel %vm186, 1, 0
    %v219 = vsel %vm187, 1, 0
    %v220 = vsel %vm188, 1, 0
    %v221 = vsel %vm189, 1, 0
    %v222 = vsel %vm190, 1, 0
    %v223 = vsel %vm191, 1, 0
    %v224 = vsel %vm192, 1, 0
    %v225 = vcvt.s32.f32 %v193
    %v226 = vcvt.s32.f32 %v194
    %v227 = vcvt.s32.f32 %v195
    %v228 = vcvt.s32.f32 %v196
    %v229 = vcvt.s32.f32 %v197
    %v230 = vcvt.s32.f32 %v198
    %v231 = vcvt.s32.f32 %v199
    %v232 = vcvt.s32.f32 %v200
    %v233 = vcvt.s32.f32 %v201
    %v234 = vcvt.s32.f32 %v202
    %v235 = vcvt.s32.f32 %v203
    %v236 = vcvt.s32.f32 %v204
    %v237 = vcvt.s32.f32 %v205
    %v238 = vcvt.s32.f32 %v206
    %v239 = vcvt.s32.f32 %v207
    %v240 = vcvt.s32.f32 %v208
    %v241 = vcvt.s32.f32 %v209
    %v242 = vcvt.s32.f32 %v210
    %v243 = vcvt.s32.f32 %v211
    %v244 = vcvt.s32.f32 %v212
    %v245 = vcvt.s32.f32 %v213
    %v246 = vcvt.s32.f32 %v214
    %v247 = vcvt.s32.f32 %v215
    %v248 = vcvt.s32.f32 %v216
    %v249 = vcvt.s32.f32 %v217
    %v250 = vcvt.s32.f32 %v218
    %v251 = vcvt.s32.f32 %v219
    %v252 = vcvt.s32.f32 %v220
    %v253 = vcvt.s32.f32 %v221
    %v254 = vcvt.s32.f32 %v222
    %v255 = vcvt.s32.f32 %v223
    %v256 = vcvt.s32.f32 %v224
    %v257 = vpack.c.bf16 %v226, %v225
    %v258 = vpack.c.bf16 %v228, %v227
    %v259 = vpack.c.bf16 %v230, %v229
    %v260 = vpack.c.bf16 %v232, %v231
    %v261 = vpack.c.bf16 %v234, %v233
    %v262 = vpack.c.bf16 %v236, %v235
    %v263 = vpack.c.bf16 %v238, %v237
    %v264 = vpack.c.bf16 %v240, %v239
    %v265 = vpack.c.bf16 %v242, %v241
    %v266 = vpack.c.bf16 %v244, %v243
    %v267 = vpack.c.bf16 %v246, %v245
    %v268 = vpack.c.bf16 %v248, %v247
    %v269 = vpack.c.bf16 %v250, %v249
    %v270 = vpack.c.bf16 %v252, %v251
    %v271 = vpack.c.bf16 %v254, %v253
    %v272 = vpack.c.bf16 %v256, %v255
    %v273 = vld [vmem:[%s1] sm:$0xff]
    %v274 = vld [vmem:[%s1 + $0x8] sm:$0xff]
    %v275 = vld [vmem:[%s1 + $0x10] sm:$0xff]
    %v276 = vld [vmem:[%s1 + $0x18] sm:$0xff]
    %v277 = vld [vmem:[%s1 + $0x20] sm:$0xff]
    %v278 = vld [vmem:[%s1 + $0x28] sm:$0xff]
    %v279 = vld [vmem:[%s1 + $0x30] sm:$0xff]
    %v280 = vld [vmem:[%s1 + $0x38] sm:$0xff]
    %v281 = vld [vmem:[%s1 + $0x40] sm:$0xff]
    %v282 = vld [vmem:[%s1 + $0x48] sm:$0xff]
    %v283 = vld [vmem:[%s1 + $0x50] sm:$0xff]
    %v284 = vld [vmem:[%s1 + $0x58] sm:$0xff]
    %v285 = vld [vmem:[%s1 + $0x60] sm:$0xff]
    %v286 = vld [vmem:[%s1 + $0x68] sm:$0xff]
    %v287 = vld [vmem:[%s1 + $0x70] sm:$0xff]
    %v288 = vld [vmem:[%s1 + $0x78] sm:$0xff]
    %v289 = vld [vmem:[%s1 + $0x80] sm:$0xff]
    %v290 = vld [vmem:[%s1 + $0x88] sm:$0xff]
    %v291 = vld [vmem:[%s1 + $0x90] sm:$0xff]
    %v292 = vld [vmem:[%s1 + $0x98] sm:$0xff]
    %v293 = vld [vmem:[%s1 + $0xa0] sm:$0xff]
    %v294 = vld [vmem:[%s1 + $0xa8] sm:$0xff]
    %v295 = vld [vmem:[%s1 + $0xb0] sm:$0xff]
    %v296 = vld [vmem:[%s1 + $0xb8] sm:$0xff]
    %v297 = vld [vmem:[%s1 + $0xc0] sm:$0xff]
    %v298 = vld [vmem:[%s1 + $0xc8] sm:$0xff]
    %v299 = vld [vmem:[%s1 + $0xd0] sm:$0xff]
    %v300 = vld [vmem:[%s1 + $0xd8] sm:$0xff]
    %v301 = vld [vmem:[%s1 + $0xe0] sm:$0xff]
    %v302 = vld [vmem:[%s1 + $0xe8] sm:$0xff]
    %v303 = vld [vmem:[%s1 + $0xf0] sm:$0xff]
    %v304 = vld [vmem:[%s1 + $0xf8] sm:$0xff]
    %305 = vset.pattern.permute.xlu0 0
    %306 = vperm.xlu0 %305, %v273
    %v307 = vpop.permute.xlu0 %306
    %308 = vset.pattern.permute.xlu0 0
    %309 = vperm.xlu0 %308, %v274
    %v310 = vpop.permute.xlu0 %309
    %311 = vset.pattern.permute.xlu0 0
    %312 = vperm.xlu0 %311, %v275
    %v313 = vpop.permute.xlu0 %312
    %314 = vset.pattern.permute.xlu0 0
    %315 = vperm.xlu0 %314, %v276
    %v316 = vpop.permute.xlu0 %315
    %317 = vset.pattern.permute.xlu0 0
    %318 = vperm.xlu0 %317, %v277
    %v319 = vpop.permute.xlu0 %318
    %320 = vset.pattern.permute.xlu0 0
    %321 = vperm.xlu0 %320, %v278
    %v322 = vpop.permute.xlu0 %321
    %323 = vset.pattern.permute.xlu0 0
    %324 = vperm.xlu0 %323, %v279
    %v325 = vpop.permute.xlu0 %324
    %326 = vset.pattern.permute.xlu0 0
    %327 = vperm.xlu0 %326, %v280
    %v328 = vpop.permute.xlu0 %327
    %329 = vset.pattern.permute.xlu0 0
    %330 = vperm.xlu0 %329, %v281
    %v331 = vpop.permute.xlu0 %330
    %332 = vset.pattern.permute.xlu0 0
    %333 = vperm.xlu0 %332, %v282
    %v334 = vpop.permute.xlu0 %333
    %335 = vset.pattern.permute.xlu0 0
    %336 = vperm.xlu0 %335, %v283
    %v337 = vpop.permute.xlu0 %336
    %338 = vset.pattern.permute.xlu0 0
    %339 = vperm.xlu0 %338, %v284
    %v340 = vpop.permute.xlu0 %339
    %341 = vset.pattern.permute.xlu0 0
    %342 = vperm.xlu0 %341, %v285
    %v343 = vpop.permute.xlu0 %342
    %344 = vset.pattern.permute.xlu0 0
    %345 = vperm.xlu0 %344, %v286
    %v346 = vpop.permute.xlu0 %345
    %347 = vset.pattern.permute.xlu0 0
    %348 = vperm.xlu0 %347, %v287
    %v349 = vpop.permute.xlu0 %348
    %350 = vset.pattern.permute.xlu0 0
    %351 = vperm.xlu0 %350, %v288
    %v352 = vpop.permute.xlu0 %351
    %353 = vset.pattern.permute.xlu0 0
    %354 = vperm.xlu0 %353, %v289
    %v355 = vpop.permute.xlu0 %354
    %356 = vset.pattern.permute.xlu0 0
    %357 = vperm.xlu0 %356, %v290
    %v358 = vpop.permute.xlu0 %357
    %359 = vset.pattern.permute.xlu0 0
    %360 = vperm.xlu0 %359, %v291
    %v361 = vpop.permute.xlu0 %360
    %362 = vset.pattern.permute.xlu0 0
    %363 = vperm.xlu0 %362, %v292
    %v364 = vpop.permute.xlu0 %363
    %365 = vset.pattern.permute.xlu0 0
    %366 = vperm.xlu0 %365, %v293
    %v367 = vpop.permute.xlu0 %366
    %368 = vset.pattern.permute.xlu0 0
    %369 = vperm.xlu0 %368, %v294
    %v370 = vpop.permute.xlu0 %369
    %371 = vset.pattern.permute.xlu0 0
    %372 = vperm.xlu0 %371, %v295
    %v373 = vpop.permute.xlu0 %372
    %374 = vset.pattern.permute.xlu0 0
    %375 = vperm.xlu0 %374, %v296
    %v376 = vpop.permute.xlu0 %375
    %377 = vset.pattern.permute.xlu0 0
    %378 = vperm.xlu0 %377, %v297
    %v379 = vpop.permute.xlu0 %378
    %380 = vset.pattern.permute.xlu0 0
    %381 = vperm.xlu0 %380, %v298
    %v382 = vpop.permute.xlu0 %381
    %383 = vset.pattern.permute.xlu0 0
    %384 = vperm.xlu0 %383, %v299
    %v385 = vpop.permute.xlu0 %384
    %386 = vset.pattern.permute.xlu0 0
    %387 = vperm.xlu0 %386, %v300
    %v388 = vpop.permute.xlu0 %387
    %389 = vset.pattern.permute.xlu0 0
    %390 = vperm.xlu0 %389, %v301
    %v391 = vpop.permute.xlu0 %390
    %392 = vset.pattern.permute.xlu0 0
    %393 = vperm.xlu0 %392, %v302
    %v394 = vpop.permute.xlu0 %393
    %395 = vset.pattern.permute.xlu0 0
    %396 = vperm.xlu0 %395, %v303
    %v397 = vpop.permute.xlu0 %396
    %398 = vset.pattern.permute.xlu0 0
    %399 = vperm.xlu0 %398, %v304
    %v400 = vpop.permute.xlu0 %399
    %vm401 = vcmp.eq.s32.totalorder %v32, %v307
    %vm402 = vcmp.eq.s32.totalorder %v32, %v310
    %vm403 = vcmp.eq.s32.totalorder %v32, %v313
    %vm404 = vcmp.eq.s32.totalorder %v32, %v316
    %vm405 = vcmp.eq.s32.totalorder %v32, %v319
    %vm406 = vcmp.eq.s32.totalorder %v32, %v322
    %vm407 = vcmp.eq.s32.totalorder %v32, %v325
    %vm408 = vcmp.eq.s32.totalorder %v32, %v328
    %vm409 = vcmp.eq.s32.totalorder %v32, %v331
    %vm410 = vcmp.eq.s32.totalorder %v32, %v334
    %vm411 = vcmp.eq.s32.totalorder %v32, %v337
    %vm412 = vcmp.eq.s32.totalorder %v32, %v340
    %vm413 = vcmp.eq.s32.totalorder %v32, %v343
    %vm414 = vcmp.eq.s32.totalorder %v32, %v346
    %vm415 = vcmp.eq.s32.totalorder %v32, %v349
    %vm416 = vcmp.eq.s32.totalorder %v32, %v352
    %vm417 = vcmp.eq.s32.totalorder %v32, %v355
    %vm418 = vcmp.eq.s32.totalorder %v32, %v358
    %vm419 = vcmp.eq.s32.totalorder %v32, %v361
    %vm420 = vcmp.eq.s32.totalorder %v32, %v364
    %vm421 = vcmp.eq.s32.totalorder %v32, %v367
    %vm422 = vcmp.eq.s32.totalorder %v32, %v370
    %vm423 = vcmp.eq.s32.totalorder %v32, %v373
    %vm424 = vcmp.eq.s32.totalorder %v32, %v376
    %vm425 = vcmp.eq.s32.totalorder %v32, %v379
    %vm426 = vcmp.eq.s32.totalorder %v32, %v382
    %vm427 = vcmp.eq.s32.totalorder %v32, %v385
    %vm428 = vcmp.eq.s32.totalorder %v32, %v388
    %vm429 = vcmp.eq.s32.totalorder %v32, %v391
    %vm430 = vcmp.eq.s32.totalorder %v32, %v394
    %vm431 = vcmp.eq.s32.totalorder %v32, %v397
    %vm432 = vcmp.eq.s32.totalorder %v32, %v400
    %v433 = vsel %vm401, 1, 0
    %v434 = vsel %vm402, 1, 0
    %v435 = vsel %vm403, 1, 0
    %v436 = vsel %vm404, 1, 0
    %v437 = vsel %vm405, 1, 0
    %v438 = vsel %vm406, 1, 0
    %v439 = vsel %vm407, 1, 0
    %v440 = vsel %vm408, 1, 0
    %v441 = vsel %vm409, 1, 0
    %v442 = vsel %vm410, 1, 0
    %v443 = vsel %vm411, 1, 0
    %v444 = vsel %vm412, 1, 0
    %v445 = vsel %vm413, 1, 0
    %v446 = vsel %vm414, 1, 0
    %v447 = vsel %vm415, 1, 0
    %v448 = vsel %vm416, 1, 0
    %v449 = vsel %vm417, 1, 0
    %v450 = vsel %vm418, 1, 0
    %v451 = vsel %vm419, 1, 0
    %v452 = vsel %vm420, 1, 0
    %v453 = vsel %vm421, 1, 0
    %v454 = vsel %vm422, 1, 0
    %v455 = vsel %vm423, 1, 0
    %v456 = vsel %vm424, 1, 0
    %v457 = vsel %vm425, 1, 0
    %v458 = vsel %vm426, 1, 0
    %v459 = vsel %vm427, 1, 0
    %v460 = vsel %vm428, 1, 0
    %v461 = vsel %vm429, 1, 0
    %v462 = vsel %vm430, 1, 0
    %v463 = vsel %vm431, 1, 0
    %v464 = vsel %vm432, 1, 0
    %v465 = vcvt.s32.f32 %v433
    %v466 = vcvt.s32.f32 %v434
    %v467 = vcvt.s32.f32 %v435
    %v468 = vcvt.s32.f32 %v436
    %v469 = vcvt.s32.f32 %v437
    %v470 = vcvt.s32.f32 %v438
    %v471 = vcvt.s32.f32 %v439
    %v472 = vcvt.s32.f32 %v440
    %v473 = vcvt.s32.f32 %v441
    %v474 = vcvt.s32.f32 %v442
    %v475 = vcvt.s32.f32 %v443
    %v476 = vcvt.s32.f32 %v444
    %v477 = vcvt.s32.f32 %v445
    %v478 = vcvt.s32.f32 %v446
    %v479 = vcvt.s32.f32 %v447
    %v480 = vcvt.s32.f32 %v448
    %v481 = vcvt.s32.f32 %v449
    %v482 = vcvt.s32.f32 %v450
    %v483 = vcvt.s32.f32 %v451
    %v484 = vcvt.s32.f32 %v452
    %v485 = vcvt.s32.f32 %v453
    %v486 = vcvt.s32.f32 %v454
    %v487 = vcvt.s32.f32 %v455
    %v488 = vcvt.s32.f32 %v456
    %v489 = vcvt.s32.f32 %v457
    %v490 = vcvt.s32.f32 %v458
    %v491 = vcvt.s32.f32 %v459
    %v492 = vcvt.s32.f32 %v460
    %v493 = vcvt.s32.f32 %v461
    %v494 = vcvt.s32.f32 %v462
    %v495 = vcvt.s32.f32 %v463
    %v496 = vcvt.s32.f32 %v464
    %v497 = vpack.c.bf16 %v466, %v465
    %v498 = vpack.c.bf16 %v468, %v467
    %v499 = vpack.c.bf16 %v470, %v469
    %v500 = vpack.c.bf16 %v472, %v471
    %v501 = vpack.c.bf16 %v474, %v473
    %v502 = vpack.c.bf16 %v476, %v475
    %v503 = vpack.c.bf16 %v478, %v477
    %v504 = vpack.c.bf16 %v480, %v479
    %v505 = vpack.c.bf16 %v482, %v481
    %v506 = vpack.c.bf16 %v484, %v483
    %v507 = vpack.c.bf16 %v486, %v485
    %v508 = vpack.c.bf16 %v488, %v487
    %v509 = vpack.c.bf16 %v490, %v489
    %v510 = vpack.c.bf16 %v492, %v491
    %v511 = vpack.c.bf16 %v494, %v493
    %v512 = vpack.c.bf16 %v496, %v495
    %513 = vxpose.xlu0.c.b16.start [1/8] %v497, 128
    %514 = vxpose.xlu0.c.b16.cont [2/8] %v498, 128
    %515 = vxpose.xlu0.c.b16.cont [3/8] %v499, 128
    %516 = vxpose.xlu0.c.b16.cont [4/8] %v500, 128
    %517 = vxpose.xlu0.c.b16.cont [5/8] %v501, 128
    %518 = vxpose.xlu0.c.b16.cont [6/8] %v502, 128
    %519 = vxpose.xlu0.c.b16.cont [7/8] %v503, 128
    %520 = vxpose.xlu0.c.b16.end [8/8] %v504, 128
    %v521 = vpop.trf.xlu0
    %v522 = vpop.trf.xlu0
    %v523 = vpop.trf.xlu0
    %v524 = vpop.trf.xlu0
    %v525 = vpop.trf.xlu0
    %v526 = vpop.trf.xlu0
    %v527 = vpop.trf.xlu0
    %v528 = vpop.trf.xlu0
    %529 = vxpose.xlu0.c.b16.start [1/8] %v505, 128
    %530 = vxpose.xlu0.c.b16.cont [2/8] %v506, 128
    %531 = vxpose.xlu0.c.b16.cont [3/8] %v507, 128
    %532 = vxpose.xlu0.c.b16.cont [4/8] %v508, 128
    %533 = vxpose.xlu0.c.b16.cont [5/8] %v509, 128
    %534 = vxpose.xlu0.c.b16.cont [6/8] %v510, 128
    %535 = vxpose.xlu0.c.b16.cont [7/8] %v511, 128
    %536 = vxpose.xlu0.c.b16.end [8/8] %v512, 128
    %v537 = vpop.trf.xlu0
    %v538 = vpop.trf.xlu0
    %v539 = vpop.trf.xlu0
    %v540 = vpop.trf.xlu0
    %v541 = vpop.trf.xlu0
    %v542 = vpop.trf.xlu0
    %v543 = vpop.trf.xlu0
    %v544 = vpop.trf.xlu0
    %545 = vmatprep.subr.bf16.mxu0 0
    %546 = vmatpush1.bf16.msra.mxu0 %v264
    %547 = vmatprep.subr.bf16.mxu0 0
    %548 = vmatpush1.bf16.msra.mxu0 %v263
    %549 = vmatprep.subr.bf16.mxu0 0
    %550 = vmatpush1.bf16.msra.mxu0 %v262
    %551 = vmatprep.subr.bf16.mxu0 0
    %552 = vmatpush1.bf16.msra.mxu0 %v261
    %553 = vmatprep.subr.bf16.mxu0 0
    %554 = vmatpush1.bf16.msra.mxu0 %v260
    %555 = vmatprep.subr.bf16.mxu0 0
    %556 = vmatpush1.bf16.msra.mxu0 %v259
    %557 = vmatprep.subr.bf16.mxu0 0
    %558 = vmatpush1.bf16.msra.mxu0 %v258
    %559 = vmatprep.subr.bf16.mxu0 0
    %560 = vmatpush1.bf16.msra.mxu0 %v257
    %561 = vmatprep.subr.bf16.mxu0 0
    %562 = vmatpush2.bf16.msra.mxu0 %v272
    %563 = vmatprep.subr.bf16.mxu0 0
    %564 = vmatpush2.bf16.msra.mxu0 %v271
    %565 = vmatprep.subr.bf16.mxu0 0
    %566 = vmatpush2.bf16.msra.mxu0 %v270
    %567 = vmatprep.subr.bf16.mxu0 0
    %568 = vmatpush2.bf16.msra.mxu0 %v269
    %569 = vmatprep.subr.bf16.mxu0 0
    %570 = vmatpush2.bf16.msra.mxu0 %v268
    %571 = vmatprep.subr.bf16.mxu0 0
    %572 = vmatpush2.bf16.msra.mxu0 %v267
    %573 = vmatprep.subr.bf16.mxu0 0
    %574 = vmatpush2.bf16.msra.mxu0 %v266
    %575 = vmatprep.subr.bf16.mxu0 0
    %576 = vmatpush2.bf16.msra.mxu0 %v265
    %577 = vmatprep.mubr.bf16.mxu0 %v537
    %578 = vmatmul.mubr.bf16.gmra.mxu0 %v521
    %v579 = vpop.f32.mrf.mxu0
    %v580 = vadd.f32 0.0, %v579
    %v581 = vpop.f32.mrf.mxu0
    %v582 = vpop.f32.mrf.mxu0
    %v583 = vadd.f32 0.0, %v582
    %v584 = vpop.f32.mrf.mxu0
    %585 = vmatprep.mubr.bf16.mxu0 %v538
    %586 = vmatmul.mubr.bf16.gmra.mxu0 %v522
    %v587 = vpop.f32.mrf.mxu0
    %v588 = vadd.f32 0.0, %v587
    %v589 = vpop.f32.mrf.mxu0
    %v590 = vpop.f32.mrf.mxu0
    %v591 = vadd.f32 0.0, %v590
    %v592 = vpop.f32.mrf.mxu0
    %593 = vmatprep.mubr.bf16.mxu0 %v539
    %594 = vmatmul.mubr.bf16.gmra.mxu0 %v523
    %v595 = vpop.f32.mrf.mxu0
    %v596 = vadd.f32 0.0, %v595
    %v597 = vpop.f32.mrf.mxu0
    %v598 = vpop.f32.mrf.mxu0
    %v599 = vadd.f32 0.0, %v598
    %v600 = vpop.f32.mrf.mxu0
    %601 = vmatprep.mubr.bf16.mxu0 %v540
    %602 = vmatmul.mubr.bf16.gmra.mxu0 %v524
    %v603 = vpop.f32.mrf.mxu0
    %v604 = vadd.f32 0.0, %v603
    %v605 = vpop.f32.mrf.mxu0
    %v606 = vpop.f32.mrf.mxu0
    %v607 = vadd.f32 0.0, %v606
    %v608 = vpop.f32.mrf.mxu0
    %609 = vdwg.mxu0
    %v610 = vpack.c.bf16 %v583, %v580
    %v611 = vpack.c.bf16 %v591, %v588
    %v612 = vpack.c.bf16 %v599, %v596
    %v613 = vpack.c.bf16 %v607, %v604
    %v614 = vld [vmem:[%s2] sm:$0xf]
    %v615 = vld [vmem:[%s2 + $0x4] sm:$0xf]
    %v616 = vld [vmem:[%s2 + $0x8] sm:$0xf]
    %v617 = vld [vmem:[%s2 + $0xc] sm:$0xf]
    %v618 = vld [vmem:[%s2 + $0x10] sm:$0xf]
    %v619 = vld [vmem:[%s2 + $0x14] sm:$0xf]
    %v620 = vld [vmem:[%s2 + $0x18] sm:$0xf]
    %v621 = vld [vmem:[%s2 + $0x1c] sm:$0xf]
    %v622 = vld [vmem:[%s3] sm:$0xff]
    %v623 = vld [vmem:[%s3 + $0x8] sm:$0xff]
    %v632 = vunpack.c.l.b16 %v614
    %v633 = vunpack.c.l.b16 %v615
    %v634 = vunpack.c.l.b16 %v616
    %v635 = vunpack.c.l.b16 %v617
    %v636 = vunpack.c.l.b16 %v618
    %v637 = vunpack.c.l.b16 %v619
    %v638 = vunpack.c.l.b16 %v620
    %v639 = vunpack.c.l.b16 %v621
    %v640 = vpack.c.b16 %v633, %v632
    %v641 = vpack.c.b16 %v635, %v634
    %v642 = vpack.c.b16 %v637, %v636
    %v643 = vpack.c.b16 %v639, %v638
    %v646 = vunpack.c.l.b16 %v622
    %v647 = vunpack.c.h.b16 %v622
    %v648 = vunpack.c.l.b16 %v623
    %v649 = vunpack.c.h.b16 %v623
    %v650 = vpack.c.b16 %v648, %v646
    %v651 = vpack.c.b16 %v649, %v647
    %vm654 = vcmask 130048
    %v656 = vsel %vm654, %v640, 0
    %v659 = vsel %vm654, %v641, 0
    %v662 = vsel %vm654, %v642, 0
    %v665 = vsel %vm654, %v643, 0
    %667 = vmatprep.subr.bf16.mxu0 0
    %668 = vmatpush1.bf16.msra.mxu0 0
    %669 = vmatprep.subr.bf16.mxu0 0
    %670 = vmatpush1.bf16.msra.mxu0 0
    %671 = vmatprep.subr.bf16.mxu0 0
    %672 = vmatpush1.bf16.msra.mxu0 0
    %673 = vmatprep.subr.bf16.mxu0 0
    %674 = vmatpush1.bf16.msra.mxu0 0
    %675 = vmatprep.subr.bf16.mxu0 0
    %676 = vmatpush1.bf16.msra.mxu0 0
    %677 = vmatprep.subr.bf16.mxu0 0
    %678 = vmatpush1.bf16.msra.mxu0 0
    %679 = vmatprep.subr.bf16.mxu0 0
    %680 = vmatpush1.bf16.msra.mxu0 0
    %681 = vmatprep.subr.bf16.mxu0 %v651
    %682 = vmatpush1.bf16.msra.mxu0 %v650
    %683 = vmatprep.subr.bf16.mxu0 0
    %684 = vmatpush2.bf16.msra.mxu0 0
    %685 = vmatprep.subr.bf16.mxu0 0
    %686 = vmatpush2.bf16.msra.mxu0 0
    %687 = vmatprep.subr.bf16.mxu0 0
    %688 = vmatpush2.bf16.msra.mxu0 0
    %689 = vmatprep.subr.bf16.mxu0 0
    %690 = vmatpush2.bf16.msra.mxu0 0
    %691 = vmatprep.subr.bf16.mxu0 0
    %692 = vmatpush2.bf16.msra.mxu0 0
    %693 = vmatprep.subr.bf16.mxu0 0
    %694 = vmatpush2.bf16.msra.mxu0 0
    %695 = vmatprep.subr.bf16.mxu0 0
    %696 = vmatpush2.bf16.msra.mxu0 0
    %697 = vmatprep.subr.bf16.mxu0 0
    %698 = vmatpush2.bf16.msra.mxu0 0
    %699 = vmatprep.mubr.bf16.mxu0 0
    %700 = vmatmul.mubr.bf16.gmra.mxu0 %v656
    %v701 = vpop.f32.mrf.mxu0
    %v702 = vadd.f32 0.0, %v701
    %v703 = vpop.f32.mrf.mxu0
    %v704 = vadd.f32 0.0, %v703
    %v705 = vpop.f32.mrf.mxu0
    %v706 = vadd.f32 0.0, %v705
    %v707 = vpop.f32.mrf.mxu0
    %v708 = vadd.f32 0.0, %v707
    %709 = vmatprep.mubr.bf16.mxu0 0
    %710 = vmatmul.mubr.bf16.gmra.mxu0 %v659
    %v711 = vpop.f32.mrf.mxu0
    %v712 = vadd.f32 0.0, %v711
    %v713 = vpop.f32.mrf.mxu0
    %v714 = vadd.f32 0.0, %v713
    %v715 = vpop.f32.mrf.mxu0
    %v716 = vadd.f32 0.0, %v715
    %v717 = vpop.f32.mrf.mxu0
    %v718 = vadd.f32 0.0, %v717
    %719 = vmatprep.mubr.bf16.mxu0 0
    %720 = vmatmul.mubr.bf16.gmra.mxu0 %v662
    %v721 = vpop.f32.mrf.mxu0
    %v722 = vadd.f32 0.0, %v721
    %v723 = vpop.f32.mrf.mxu0
    %v724 = vadd.f32 0.0, %v723
    %v725 = vpop.f32.mrf.mxu0
    %v726 = vadd.f32 0.0, %v725
    %v727 = vpop.f32.mrf.mxu0
    %v728 = vadd.f32 0.0, %v727
    %729 = vmatprep.mubr.bf16.mxu0 0
    %730 = vmatmul.mubr.bf16.gmra.mxu0 %v665
    %v731 = vpop.f32.mrf.mxu0
    %v732 = vadd.f32 0.0, %v731
    %v733 = vpop.f32.mrf.mxu0
    %v734 = vadd.f32 0.0, %v733
    %v735 = vpop.f32.mrf.mxu0
    %v736 = vadd.f32 0.0, %v735
    %v737 = vpop.f32.mrf.mxu0
    %v738 = vadd.f32 0.0, %v737
    %739 = vdwg.mxu0
    %v740 = vpack.c.bf16 %v706, %v702
    %v741 = vpack.c.bf16 %v716, %v712
    %v742 = vpack.c.bf16 %v726, %v722
    %v743 = vpack.c.bf16 %v736, %v732
    %vm744 = vcmask 523264
    %v746 = vsel %vm744, %v610, 0
    %v749 = vsel %vm744, %v611, 0
    %v752 = vsel %vm744, %v612, 0
    %v755 = vsel %vm744, %v613, 0
    %757 = vmatprep.subr.bf16.mxu0 0
    %758 = vmatpush1.bf16.msra.mxu0 0
    %759 = vmatprep.subr.bf16.mxu0 0
    %760 = vmatpush1.bf16.msra.mxu0 0
    %761 = vmatprep.subr.bf16.mxu0 0
    %762 = vmatpush1.bf16.msra.mxu0 0
    %763 = vmatprep.subr.bf16.mxu0 0
    %764 = vmatpush1.bf16.msra.mxu0 0
    %765 = vmatprep.subr.bf16.mxu0 0
    %766 = vmatpush1.bf16.msra.mxu0 %v743
    %767 = vmatprep.subr.bf16.mxu0 0
    %768 = vmatpush1.bf16.msra.mxu0 %v742
    %769 = vmatprep.subr.bf16.mxu0 0
    %770 = vmatpush1.bf16.msra.mxu0 %v741
    %771 = vmatprep.subr.bf16.mxu0 0
    %772 = vmatpush1.bf16.msra.mxu0 %v740
    %773 = vmatprep.subr.bf16.mxu0 0
    %774 = vmatpush2.bf16.msra.mxu0 0
    %775 = vmatprep.subr.bf16.mxu0 0
    %776 = vmatpush2.bf16.msra.mxu0 0
    %777 = vmatprep.subr.bf16.mxu0 0
    %778 = vmatpush2.bf16.msra.mxu0 0
    %779 = vmatprep.subr.bf16.mxu0 0
    %780 = vmatpush2.bf16.msra.mxu0 0
    %781 = vmatprep.subr.bf16.mxu0 0
    %782 = vmatpush2.bf16.msra.mxu0 0
    %783 = vmatprep.subr.bf16.mxu0 0
    %784 = vmatpush2.bf16.msra.mxu0 0
    %785 = vmatprep.subr.bf16.mxu0 0
    %786 = vmatpush2.bf16.msra.mxu0 0
    %787 = vmatprep.subr.bf16.mxu0 0
    %788 = vmatpush2.bf16.msra.mxu0 0
    %789 = vmatprep.mubr.bf16.mxu0 0
    %790 = vmatmul.mubr.bf16.gmra.mxu0 %v746
    %v791 = vpop.f32.mrf.mxu0
    %v792 = vadd.f32 %v704, %v791
    %v793 = vpop.f32.mrf.mxu0
    %v794 = vpop.f32.mrf.mxu0
    %v795 = vadd.f32 %v708, %v794
    %v796 = vpop.f32.mrf.mxu0
    %797 = vmatprep.mubr.bf16.mxu0 0
    %798 = vmatmul.mubr.bf16.gmra.mxu0 %v749
    %v799 = vpop.f32.mrf.mxu0
    %v800 = vadd.f32 %v714, %v799
    %v801 = vpop.f32.mrf.mxu0
    %v802 = vpop.f32.mrf.mxu0
    %v803 = vadd.f32 %v718, %v802
    %v804 = vpop.f32.mrf.mxu0
    %805 = vmatprep.mubr.bf16.mxu0 0
    %806 = vmatmul.mubr.bf16.gmra.mxu0 %v752
    %v807 = vpop.f32.mrf.mxu0
    %v808 = vadd.f32 %v724, %v807
    %v809 = vpop.f32.mrf.mxu0
    %v810 = vpop.f32.mrf.mxu0
    %v811 = vadd.f32 %v728, %v810
    %v812 = vpop.f32.mrf.mxu0
    %813 = vmatprep.mubr.bf16.mxu0 0
    %814 = vmatmul.mubr.bf16.gmra.mxu0 %v755
    %v815 = vpop.f32.mrf.mxu0
    %v816 = vadd.f32 %v734, %v815
    %v817 = vpop.f32.mrf.mxu0
    %v818 = vpop.f32.mrf.mxu0
    %v819 = vadd.f32 %v738, %v818
    %v820 = vpop.f32.mrf.mxu0
    %821 = vdwg.mxu0
    %v822 = vld [vmem:[%s4] sm:$0x1]
    %v824 = vlaneseq
    %v825 = vshrl.u32 %v824, 7
    %v826 = vsub.s32 0, %v825
    %v827 = vrot.slane %v822, %v826
    %v829 = vadd.f32 %v792, %v827
    %v830 = vadd.f32 %v795, %v827
    %v831 = vadd.f32 %v800, %v827
    %v832 = vadd.f32 %v803, %v827
    %v833 = vadd.f32 %v808, %v827
    %v834 = vadd.f32 %v811, %v827
    %v835 = vadd.f32 %v816, %v827
    %v836 = vadd.f32 %v819, %v827
    %v837 = vmax.f32 %v829, 0.0
    %v838 = vmax.f32 %v830, 0.0
    %v839 = vmax.f32 %v831, 0.0
    %v840 = vmax.f32 %v832, 0.0
    %v841 = vmax.f32 %v833, 0.0
    %v842 = vmax.f32 %v834, 0.0
    %v843 = vmax.f32 %v835, 0.0
    %v844 = vmax.f32 %v836, 0.0
    %v845 = vpack.c.bf16 %v838, %v837
    %v846 = vpack.c.bf16 %v840, %v839
    %v847 = vpack.c.bf16 %v842, %v841
    %v848 = vpack.c.bf16 %v844, %v843
    %v849 = vld [vmem:[%s5] sm:$0xff]
    %v850 = vld [vmem:[%s5 + $0x8] sm:$0xff]
    %v851 = vld [vmem:[%s5 + $0x10] sm:$0xff]
    %v852 = vld [vmem:[%s5 + $0x18] sm:$0xff]
    %v853 = vld [vmem:[%s5 + $0x20] sm:$0xff]
    %v854 = vld [vmem:[%s5 + $0x28] sm:$0xff]
    %v855 = vld [vmem:[%s5 + $0x30] sm:$0xff]
    %v856 = vld [vmem:[%s5 + $0x38] sm:$0xff]
    %v857 = vld [vmem:[%s5 + $0x40] sm:$0xff]
    %v858 = vld [vmem:[%s5 + $0x48] sm:$0xff]
    %v859 = vld [vmem:[%s5 + $0x50] sm:$0xff]
    %v860 = vld [vmem:[%s5 + $0x58] sm:$0xff]
    %v861 = vld [vmem:[%s5 + $0x60] sm:$0xff]
    %v862 = vld [vmem:[%s5 + $0x68] sm:$0xff]
    %v863 = vld [vmem:[%s5 + $0x70] sm:$0xff]
    %v864 = vld [vmem:[%s5 + $0x78] sm:$0xff]
    %v881 = vunpack.c.l.b16 %v849
    %v882 = vunpack.c.h.b16 %v849
    %v883 = vunpack.c.l.b16 %v850
    %v884 = vunpack.c.h.b16 %v850
    %v885 = vunpack.c.l.b16 %v851
    %v886 = vunpack.c.h.b16 %v851
    %v887 = vunpack.c.l.b16 %v852
    %v888 = vunpack.c.h.b16 %v852
    %v889 = vunpack.c.l.b16 %v853
    %v890 = vunpack.c.h.b16 %v853
    %v891 = vunpack.c.l.b16 %v854
    %v892 = vunpack.c.h.b16 %v854
    %v893 = vunpack.c.l.b16 %v855
    %v894 = vunpack.c.h.b16 %v855
    %v895 = vunpack.c.l.b16 %v856
    %v896 = vunpack.c.h.b16 %v856
    %v897 = vunpack.c.l.b16 %v857
    %v898 = vunpack.c.h.b16 %v857
    %v899 = vunpack.c.l.b16 %v858
    %v900 = vunpack.c.h.b16 %v858
    %v901 = vunpack.c.l.b16 %v859
    %v902 = vunpack.c.h.b16 %v859
    %v903 = vunpack.c.l.b16 %v860
    %v904 = vunpack.c.h.b16 %v860
    %v905 = vunpack.c.l.b16 %v861
    %v906 = vunpack.c.h.b16 %v861
    %v907 = vunpack.c.l.b16 %v862
    %v908 = vunpack.c.h.b16 %v862
    %v909 = vunpack.c.l.b16 %v863
    %v910 = vunpack.c.h.b16 %v863
    %v911 = vunpack.c.l.b16 %v864
    %v912 = vunpack.c.h.b16 %v864
    %v913 = vpack.c.b16 %v883, %v881
    %v914 = vpack.c.b16 %v884, %v882
    %v915 = vpack.c.b16 %v887, %v885
    %v916 = vpack.c.b16 %v888, %v886
    %v917 = vpack.c.b16 %v891, %v889
    %v918 = vpack.c.b16 %v892, %v890
    %v919 = vpack.c.b16 %v895, %v893
    %v920 = vpack.c.b16 %v896, %v894
    %v921 = vpack.c.b16 %v899, %v897
    %v922 = vpack.c.b16 %v900, %v898
    %v923 = vpack.c.b16 %v903, %v901
    %v924 = vpack.c.b16 %v904, %v902
    %v925 = vpack.c.b16 %v907, %v905
    %v926 = vpack.c.b16 %v908, %v906
    %v927 = vpack.c.b16 %v911, %v909
    %v928 = vpack.c.b16 %v912, %v910
    %945 = vmatprep.subr.bf16.mxu0 %v928
    %946 = vmatpush1.bf16.msra.mxu0 %v927
    %947 = vmatprep.subr.bf16.mxu0 %v926
    %948 = vmatpush1.bf16.msra.mxu0 %v925
    %949 = vmatprep.subr.bf16.mxu0 %v924
    %950 = vmatpush1.bf16.msra.mxu0 %v923
    %951 = vmatprep.subr.bf16.mxu0 %v922
    %952 = vmatpush1.bf16.msra.mxu0 %v921
    %953 = vmatprep.subr.bf16.mxu0 %v920
    %954 = vmatpush1.bf16.msra.mxu0 %v919
    %955 = vmatprep.subr.bf16.mxu0 %v918
    %956 = vmatpush1.bf16.msra.mxu0 %v917
    %957 = vmatprep.subr.bf16.mxu0 %v916
    %958 = vmatpush1.bf16.msra.mxu0 %v915
    %959 = vmatprep.subr.bf16.mxu0 %v914
    %960 = vmatpush1.bf16.msra.mxu0 %v913
    %961 = vmatprep.subr.bf16.mxu0 0
    %962 = vmatpush2.bf16.msra.mxu0 0
    %963 = vmatprep.subr.bf16.mxu0 0
    %964 = vmatpush2.bf16.msra.mxu0 0
    %965 = vmatprep.subr.bf16.mxu0 0
    %966 = vmatpush2.bf16.msra.mxu0 0
    %967 = vmatprep.subr.bf16.mxu0 0
    %968 = vmatpush2.bf16.msra.mxu0 0
    %969 = vmatprep.subr.bf16.mxu0 0
    %970 = vmatpush2.bf16.msra.mxu0 0
    %971 = vmatprep.subr.bf16.mxu0 0
    %972 = vmatpush2.bf16.msra.mxu0 0
    %973 = vmatprep.subr.bf16.mxu0 0
    %974 = vmatpush2.bf16.msra.mxu0 0
    %975 = vmatprep.subr.bf16.mxu0 0
    %976 = vmatpush2.bf16.msra.mxu0 0
    %977 = vmatprep.mubr.bf16.mxu0 0
    %978 = vmatmul.mubr.bf16.gmra.mxu0 %v845
    %v979 = vpop.f32.mrf.mxu0
    %v980 = vadd.f32 0.0, %v979
    %v981 = vpop.f32.mrf.mxu0
    %v982 = vadd.f32 0.0, %v981
    %v983 = vpop.f32.mrf.mxu0
    %v984 = vadd.f32 0.0, %v983
    %v985 = vpop.f32.mrf.mxu0
    %v986 = vadd.f32 0.0, %v985
    %987 = vmatprep.mubr.bf16.mxu0 0
    %988 = vmatmul.mubr.bf16.gmra.mxu0 %v846
    %v989 = vpop.f32.mrf.mxu0
    %v990 = vadd.f32 0.0, %v989
    %v991 = vpop.f32.mrf.mxu0
    %v992 = vpop.f32.mrf.mxu0
    %v993 = vadd.f32 0.0, %v992
    %v994 = vpop.f32.mrf.mxu0
    %995 = vmatprep.mubr.bf16.mxu0 0
    %996 = vmatmul.mubr.bf16.gmra.mxu0 %v847
    %v997 = vpop.f32.mrf.mxu0
    %v998 = vadd.f32 0.0, %v997
    %v999 = vpop.f32.mrf.mxu0
    %v1000 = vpop.f32.mrf.mxu0
    %v1001 = vadd.f32 0.0, %v1000
    %v1002 = vpop.f32.mrf.mxu0
    %1003 = vmatprep.mubr.bf16.mxu0 0
    %1004 = vmatmul.mubr.bf16.gmra.mxu0 %v848
    %v1005 = vpop.f32.mrf.mxu0
    %v1006 = vadd.f32 0.0, %v1005
    %v1007 = vpop.f32.mrf.mxu0
    %v1008 = vpop.f32.mrf.mxu0
    %v1009 = vadd.f32 0.0, %v1008
    %v1010 = vpop.f32.mrf.mxu0
    %1011 = vdwg.mxu0
    %v1012 = vpack.c.bf16 %v984, %v980
    %v1013 = vpack.c.bf16 %v993, %v990
    %v1014 = vpack.c.bf16 %v1001, %v998
    %v1015 = vpack.c.bf16 %v1009, %v1006
    %1016 = vmatprep.subr.bf16.mxu0 0
    %1017 = vmatpush1.bf16.msra.mxu0 0
    %1018 = vmatprep.subr.bf16.mxu0 0
    %1019 = vmatpush1.bf16.msra.mxu0 0
    %1020 = vmatprep.subr.bf16.mxu0 0
    %1021 = vmatpush1.bf16.msra.mxu0 0
    %1022 = vmatprep.subr.bf16.mxu0 0
    %1023 = vmatpush1.bf16.msra.mxu0 0
    %1024 = vmatprep.subr.bf16.mxu0 0
    %1025 = vmatpush1.bf16.msra.mxu0 %v1015
    %1026 = vmatprep.subr.bf16.mxu0 0
    %1027 = vmatpush1.bf16.msra.mxu0 %v1014
    %1028 = vmatprep.subr.bf16.mxu0 0
    %1029 = vmatpush1.bf16.msra.mxu0 %v1013
    %1030 = vmatprep.subr.bf16.mxu0 0
    %1031 = vmatpush1.bf16.msra.mxu0 %v1012
    %1032 = vmatprep.subr.bf16.mxu0 0
    %1033 = vmatpush2.bf16.msra.mxu0 0
    %1034 = vmatprep.subr.bf16.mxu0 0
    %1035 = vmatpush2.bf16.msra.mxu0 0
    %1036 = vmatprep.subr.bf16.mxu0 0
    %1037 = vmatpush2.bf16.msra.mxu0 0
    %1038 = vmatprep.subr.bf16.mxu0 0
    %1039 = vmatpush2.bf16.msra.mxu0 0
    %1040 = vmatprep.subr.bf16.mxu0 0
    %1041 = vmatpush2.bf16.msra.mxu0 0
    %1042 = vmatprep.subr.bf16.mxu0 0
    %1043 = vmatpush2.bf16.msra.mxu0 0
    %1044 = vmatprep.subr.bf16.mxu0 0
    %1045 = vmatpush2.bf16.msra.mxu0 0
    %1046 = vmatprep.subr.bf16.mxu0 0
    %1047 = vmatpush2.bf16.msra.mxu0 0
    %1048 = vmatprep.mubr.bf16.mxu0 0
    %1049 = vmatmul.mubr.bf16.gmra.mxu0 %v746
    %v1050 = vpop.f32.mrf.mxu0
    %v1051 = vadd.f32 %v982, %v1050
    %v1052 = vpop.f32.mrf.mxu0
    %v1053 = vpop.f32.mrf.mxu0
    %v1054 = vadd.f32 %v986, %v1053
    %v1055 = vpop.f32.mrf.mxu0
    %1056 = vdwg.mxu0
    %v1057 = vld [vmem:[%s6] sm:$0x1]
    %v1059 = vlaneseq
    %v1060 = vshrl.u32 %v1059, 7
    %v1061 = vsub.s32 0, %v1060
    %v1062 = vrot.slane %v1057, %v1061
    %v1064 = vadd.f32 %v1051, %v1062
    %v1065 = vadd.f32 %v1054, %v1062
    %vm1066 = vcmp.lt.s32.totalorder %v32, 4
    %v1067 = vsel %vm1066, %v1064, -1e+30
    %v1068 = vsel %vm1066, %v1065, -1e+30
    %1069 = vmax.xlane.f32.xlu0 %v1067
    %v1070 = vpop.xlane.xlu0 %1069
    %1071 = vmax.xlane.f32.xlu0 %v1068
    %v1072 = vpop.xlane.xlu0 %1071
    %v1073 = vsub.f32 %v1067, %v1070
    %v1074 = vsub.f32 %v1068, %v1072
    %v1075 = vmul.f32 %v1073, 1.442695
    %v1076 = vpow.pop %v1075
    %v1077 = vmul.f32 %v1074, 1.442695
    %v1078 = vpow.pop %v1077
    %1079 = vadd.xlane.f32.xlu0 %v1076
    %v1080 = vpop.xlane.xlu0 %1079
    %1081 = vadd.xlane.f32.xlu0 %v1078
    %v1082 = vpop.xlane.xlu0 %1081
    %v1083 = vlog2.pop %v1080
    %v1084 = vmul.f32 %v1083, 0.6931472
    %v1085 = vlog2.pop %v1082
    %v1086 = vmul.f32 %v1085, 0.6931472
    %v1087 = vld [vmem:[%s7] sm:$0xff]
    %v1088 = vld [vmem:[%s7 + $0x8] sm:$0xff]
    %1089 = vset.pattern.permute.xlu0 0
    %1090 = vperm.xlu0 %1089, %v1087
    %v1091 = vpop.permute.xlu0 %1090
    %1092 = vset.pattern.permute.xlu0 0
    %1093 = vperm.xlu0 %1092, %v1088
    %v1094 = vpop.permute.xlu0 %1093
    %vm1095 = vcmp.eq.s32.totalorder %v32, %v1091
    %vm1096 = vcmp.eq.s32.totalorder %v32, %v1094
    %v1097 = vsel %vm1095, 1, 0
    %v1098 = vsel %vm1096, 1, 0
    %v1099 = vcvt.s32.f32 %v1097
    %v1100 = vcvt.s32.f32 %v1098
    %v1101 = vsub.f32 %v1073, %v1084
    %v1102 = vsub.f32 %v1074, %v1086
    %v1103 = vmul.f32 %v1099, %v1101
    %v1104 = vmul.f32 %v1100, %v1102
    %1105 = vadd.xlane.f32.xlu0 %v1103
    %v1106 = vpop.xlane.xlu0 %1105
    %1107 = vadd.xlane.f32.xlu0 %v1104
    %v1108 = vpop.xlane.xlu0 %1107
    %v1109 = vlaneseq
    %v1110 = vshrl.u32 %v1109, 7
    %v1111 = vadd.s32 %v1110, 8
    %vm1112 = vcmp.lt.s32.totalorder %v1110, 16
    %vm1113 = vcmp.lt.s32.totalorder %v1111, 16
    %v1114 = vsel %vm1112, 1.0, 0.0
    %v1115 = vsel %vm1113, 1.0, 0.0
    %v1116 = vmul.f32 %v1106, %v1114
    %v1117 = vmul.f32 %v1108, %v1115
    %v1118 = vadd.f32 %v1116, %v1117
    %v1119 = vrot.slane %v1118, 4
    %v1120 = vadd.f32 %v1118, %v1119
    %v1121 = vrot.slane %v1120, 2
    %v1122 = vadd.f32 %v1120, %v1121
    %v1123 = vrot.slane %v1122, 1
    %v1124 = vadd.f32 %v1122, %v1123
    %v1125 = vsub.f32 0.0, %v1124
    %v1126 = vrcp.pop 16.0
    %v1127 = vmul.f32 %v1125, %v1126
    %vm1128 = vcmask 0
    %1129 = vst.msk [vmem:[#allocation2] sm:$0x1] %vm1128, %v1127
    // Predicated region
    $region34: #{test_module_forward.1} parent=1 // pred_check
      _
    $region35: #{test_module_forward.1} parent=1 // pred_check_branch
      %1131 = sbr.rel (0) target = $region37
    $region36: #{test_module_forward.1} parent=1 // pred_region
      %s1133 = ssub.s32 16, 16
      %1134 = vsyncadd [#allocation3], %s1133
      %s1136 = sshll.u32 [#allocation2], 4
      %s1137 = int_to_ptr.vmem [resolvable:$true] %s1136
      %1139 = dma.vmem_to_hbm [thread:$0]  %s1137, 16, %s8, [#allocation3]
    $region37: #{test_module_forward.1} parent=1 // pred_fallthru
      _
    // Predicated region
    $region38: #{test_module_forward.1} parent=1 // pred_check
      _
    $region39: #{test_module_forward.1} parent=1 // pred_check_branch
      %1141 = sbr.rel (0) target = $region41
    $region40: #{test_module_forward.1} parent=1 // pred_region
      %1142 = dma.done [#allocation3], 16
    $region41: #{test_module_forward.1} parent=1 // pred_fallthru
      _
    %1143 = vsyncpa [#allocation3], 1

</llo_original>
